<compile_context>
chip_gen: v6e
topology: v6e:2x2x1
jax: 0.10.0
libtpu: 0.0.40
codegen_flags: <defaults>
</compile_context>

<pallas_src>
import numpy as np
import jax
import jax.numpy as jnp
from jax import lax
from jax.experimental import pallas as pl
from jax.experimental.pallas import tpu as pltpu

# ----------------------------- configuration ------------------------------
N, H, W = 2, 16, 16
INPLANES, PLANES = 4, 8            # in_channels=4, out_channels=8
STRIDE = 2
PAD = 1                            # 3x3 pad; 5x5 uses 2*PAD
PAD_MAX = 2                        # max halo -> single padded copy of x
BN_EPS = 1e-5
HO = (H + 2 * PAD - 3) // STRIDE + 1   # 8
WO = (W + 2 * PAD - 3) // STRIDE + 1   # 8

WP = W + 2 * PAD_MAX               # 20 padded columns
LIN = WP * INPLANES                # 80  lane-folded input width per row
LOUT = WO * PLANES                 # 64  lane-folded dense-branch output width
LDW = WO * INPLANES                # 32  lane-folded depthwise output width
NTAP = 5                           # vertical taps covering all three branches
KT = NTAP * LIN                    # 400 true contraction size
K_PAD = 512                        # padded contraction (multiple of 128 / 256)
NCOL = 2 * LOUT + LDW              # 160 fused output columns: [y3 | y5 | dw]


# ------------------------------ Pallas kernel ------------------------------
def _conv_block_kernel(x_ref,      # (N*HO, K_PAD)  im2row activation slab (K zero-padded)
                       w_ref,      # (K_PAD, NCOL)  fused banded weights (theta folded)
                       b_ref,      # (1, NCOL)      fused biases (BN + theta folded)
                       mpw_ref,    # (LDW, LOUT)    block-diag 1x1 pointwise (theta folded)
                       bpw_ref,    # (1, LOUT)      pointwise bias (theta folded)
                       o_ref):     # (N*HO, LOUT)
    f32 = jnp.float32

    # One MXU matmul produces all three branch pre-activations.
    acc = jnp.dot(x_ref[...], w_ref[...], preferred_element_type=f32)   # (M, 160)
    z = jnp.maximum(acc + b_ref[...], 0.0)

    y35 = z[:, 0:LOUT] + z[:, LOUT:2 * LOUT]          # theta0*y3 + theta1*y5 (theta pre-folded)
    ydw = z[:, 2 * LOUT:]                             # depthwise branch activations (32 lanes)

    # Pointwise 1x1 conv of branch2, then final mix (theta2 pre-folded into mpw/bpw).
    ypw = jnp.maximum(
        jnp.dot(ydw, mpw_ref[...], preferred_element_type=f32) + bpw_ref[...], 0.0)

    o_ref[...] = (y35 + ypw).astype(o_ref.dtype)


# ------------------------- parameter packing (wrapper) ----------------------
def _band_select(wp, wo, k, offset):
    """S[win, wo, kw] = 1 iff win == 2*wo + kw + offset (stride-2 band structure)."""
    s = np.zeros((wp, wo, k), np.float32)
    for o in range(wo):
        for kk in range(k):
            win = 2 * o + kk + offset
            if 0 <= win < wp:
                s[win, o, kk] = 1.0
    return jnp.asarray(s)


def pack_params(raw):
    """Fold eval-mode BN + theta and pack all conv weights into ONE banded matmul matrix."""
    s = 1.0 / np.sqrt(1.0 + BN_EPS)          # BN fold: gamma=1, beta=0, mean=0, var=1
    t = raw['theta']

    # theta folding: theta>0 and ReLU is positively homogeneous -> theta*ReLU(z)=ReLU(theta*z)
    w3, b3 = raw['w3'] * (s * t[0]), raw['b3'] * (s * t[0])
    w5, b5 = raw['w5'] * (s * t[1]), raw['b5'] * (s * t[1])
    wdw, bdw = raw['wdw'] * s, raw['bdw'] * s                      # theta2 applied post-pointwise
    wpw, bpw = raw['wpw'] * (s * t[2]), raw['bpw'] * (s * t[2])

    s5 = _band_select(WP, WO, 5, 0)          # 5x5, pad 2 -> horizontal offset 0
    s3 = _band_select(WP, WO, 3, 1)          # 3x3 / dw, pad 1 -> horizontal offset 1

    # Per-tap banded matrices: M[a][win*Cin+ci, wo*Cout+co] = w[a, win-2*wo-off, ci, co] in band.
    m5 = jnp.einsum('xok,akcd->axcod', s5, w5).reshape(5, LIN, LOUT)
    m3 = jnp.einsum('xok,akcd->axcod', s3, w3).reshape(3, LIN, LOUT)

    # Depthwise conv: diagonal in channels.
    mdwp = jnp.einsum('xok,akc->axco', s3, wdw)                    # (3, WP, Cin, WO)
    mdw = (mdwp[:, :, :, :, None] *
           jnp.eye(INPLANES, dtype=jnp.float32)[None, None, :, None, :]
           ).reshape(3, LIN, LDW)

    # Fuse every tap of every branch into ONE (K_PAD, NCOL) matrix.
    # Rows: tap a (0..4) occupies a*LIN:(a+1)*LIN; rows 400..511 are zero padding.
    # Cols: [y3 (0:64) | y5 (64:128) | dw (128:160)].
    w_fused = jnp.zeros((K_PAD, NCOL), jnp.float32)
    for a in range(NTAP):                                          # 5x5 uses taps 0..4
        w_fused = w_fused.at[a * LIN:(a + 1) * LIN, LOUT:2 * LOUT].set(m5[a])
    for kh in range(3):                                            # 3x3 / dw use taps 1..3
        a = kh + 1
        w_fused = w_fused.at[a * LIN:(a + 1) * LIN, 0:LOUT].set(m3[kh])
        w_fused = w_fused.at[a * LIN:(a + 1) * LIN, 2 * LOUT:].set(mdw[kh])

    # Fused bias row over the same column layout.
    b_fused = jnp.concatenate(
        [jnp.tile(b3, WO), jnp.tile(b5, WO), jnp.tile(bdw, WO)]).reshape(1, NCOL)

    # 1x1 pointwise conv on the folded dw output: block-diagonal over wo.
    mpw = jnp.einsum('ow,cd->ocwd', jnp.eye(WO, dtype=jnp.float32), wpw).reshape(LDW, LOUT)

    return dict(w_fused=w_fused, b_fused=b_fused, mpw=mpw,
                bpw=jnp.tile(bpw, WO).reshape(1, LOUT))


# ------------------------------- forward pass -------------------------------
@jax.jit
def conv_block_forward(x, packed):
    n, h, w, cin = x.shape
    # Pad ONCE to the max halo, lane-fold (W, Cin).
    xp = jnp.pad(x, ((0, 0), (PAD_MAX, PAD_MAX), (PAD_MAX, PAD_MAX), (0, 0)))
    xpf = xp.reshape(n, h + 2 * PAD_MAX, (w + 2 * PAD_MAX) * cin)      # (N, 20, 80)

    # Wrapper-side im2row over the 5 vertical taps (stride 2): slab[n, ho, a*80:(a+1)*80]
    # = padded row 2*ho + a.  Batch is folded into the matmul M dimension (M = N*HO = 16).
    taps = [xpf[:, a:a + 2 * HO:2, :] for a in range(NTAP)]            # 5 x (N, HO, 80)
    slab = jnp.stack(taps, axis=2).reshape(n, HO, KT)                  # (N, HO, 400)
    slab = jnp.pad(slab, ((0, 0), (0, 0), (0, K_PAD - KT)))            # zero-pad K -> 512
    slab = slab.reshape(n * HO, K_PAD)                                 # (16, 512)

    out = pl.pallas_call(
        _conv_block_kernel,
        out_shape=jax.ShapeDtypeStruct((n * HO, LOUT), jnp.float32),
        in_specs=[
            pl.BlockSpec(memory_space=pltpu.MemorySpace.VMEM),         # slab
            pl.BlockSpec(memory_space=pltpu.MemorySpace.VMEM),         # w_fused
            pl.BlockSpec(memory_space=pltpu.MemorySpace.VMEM),         # b_fused
            pl.BlockSpec(memory_space=pltpu.MemorySpace.VMEM),         # mpw
            pl.BlockSpec(memory_space=pltpu.MemorySpace.VMEM),         # bpw
        ],
        out_specs=pl.BlockSpec(memory_space=pltpu.MemorySpace.VMEM),
    )(slab, packed['w_fused'], packed['b_fused'], packed['mpw'], packed['bpw'])

    return out.reshape(n, HO, WO, PLANES)                              # NHWC, free reshape


# ----------------------------- parameters (synthetic) ------------------------
def init_params(key):
    ks = jax.random.split(key, 8)

    def kaiming(k, shape, fan_in):
        return jax.random.normal(k, shape, jnp.float32) * np.sqrt(2.0 / fan_in)

    p = {}
    p['w3'] = kaiming(ks[0], (3, 3, INPLANES, PLANES), 9 * INPLANES)    # HWIO
    p['b3'] = jax.random.normal(ks[1], (PLANES,), jnp.float32) * 0.05
    p['w5'] = kaiming(ks[2], (5, 5, INPLANES, PLANES), 25 * INPLANES)
    p['b5'] = jax.random.normal(ks[3], (PLANES,), jnp.float32) * 0.05
    p['wdw'] = kaiming(ks[4], (3, 3, INPLANES), 9)                      # per-channel dw filters
    p['bdw'] = jax.random.normal(ks[5], (INPLANES,), jnp.float32) * 0.05
    p['wpw'] = kaiming(ks[6], (INPLANES, PLANES), INPLANES)             # 1x1 conv
    p['bpw'] = jax.random.normal(ks[7], (PLANES,), jnp.float32) * 0.05
    # PITSuperNetModule: alpha initialized uniform; gumbel=False -> theta = softmax(alpha) = 1/3 each.
    p['theta'] = jax.nn.softmax(jnp.full((3,), 1.0 / 3.0, jnp.float32))
    return p


# ----------------------------- pure-JAX reference ----------------------------
def ref_forward(x, raw):
    s = 1.0 / np.sqrt(1.0 + BN_EPS)

    def conv(a, w_hwio, b, stride, pad, groups=1):
        y = lax.conv_general_dilated(
            a, w_hwio, (stride, stride), [(pad, pad), (pad, pad)],
            dimension_numbers=('NHWC', 'HWIO', 'NHWC'),
            feature_group_count=groups)
        return jnp.maximum(s * (y + b.reshape(1, 1, 1, -1)), 0.0)       # conv + BN(eval) + ReLU

    y3 = conv(x, raw['w3'], raw['b3'], STRIDE, PAD)
    y5 = conv(x, raw['w5'], raw['b5'], STRIDE, 2 * PAD)
    ydw = conv(x, raw['wdw'].reshape(3, 3, 1, INPLANES), raw['bdw'], STRIDE, PAD, groups=INPLANES)
    ypw = conv(ydw, raw['wpw'].reshape(1, 1, INPLANES, PLANES), raw['bpw'], 1, 0)
    t = raw['theta']
    return t[0] * y3 + t[1] * y5 + t[2] * ypw


# ----------------------------------- main ------------------------------------
if __name__ == "__main__":
    key = jax.random.PRNGKey(0)
    kx, kp = jax.random.split(key)
    x = jax.random.normal(kx, (N, H, W, INPLANES), jnp.float32)   # NHWC (PyTorch: [2,4,16,16] NCHW)
    raw = init_params(kp)
    packed = pack_params(raw)

    y = conv_block_forward(x, packed)
    y = jax.block_until_ready(y)

    y_ref = ref_forward(x, raw)
    assert y.shape == (N, HO, WO, PLANES)
    np.testing.assert_allclose(np.asarray(y), np.asarray(y_ref), rtol=1e-4, atol=1e-4)

    print("KERNEL_OK")
</pallas_src>

<mosaic_0001>
module attributes {stable_mosaic.version = 11 : i64} {
  func.func @_conv_block_kernel(%arg0: memref<16x512xf32, #tpu.memory_space<vmem>>, %arg1: memref<512x160xf32, #tpu.memory_space<vmem>>, %arg2: memref<1x160xf32, #tpu.memory_space<vmem>>, %arg3: memref<32x64xf32, #tpu.memory_space<vmem>>, %arg4: memref<1x64xf32, #tpu.memory_space<vmem>>, %arg5: memref<16x64xf32, #tpu.memory_space<vmem>>) attributes {dimension_semantics = [], scalar_prefetch = 0 : i64, scratch_operands = 0 : i64, tpu.core_type = #tpu.core_type<tc>} {
    %c0 = arith.constant 0 : index
    %c0_0 = arith.constant 0 : index
    %0 = vector.load %arg0[%c0, %c0_0] : memref<16x512xf32, #tpu.memory_space<vmem>>, vector<16x512xf32>
    %c0_1 = arith.constant 0 : index
    %c0_2 = arith.constant 0 : index
    %1 = vector.load %arg1[%c0_1, %c0_2] : memref<512x160xf32, #tpu.memory_space<vmem>>, vector<512x160xf32>
    %cst = arith.constant dense<0.000000e+00> : vector<16x160xf32>
    %2 = tpu.matmul %0, %1, %cst {dimension_numbers = #tpu.dot_dimension_numbers<[1], [0], [0], [1], [0, 0, 1, 1], [], []>} : vector<16x512xf32>, vector<512x160xf32>, vector<16x160xf32> -> vector<16x160xf32>
    %c0_3 = arith.constant 0 : index
    %c0_4 = arith.constant 0 : index
    %3 = vector.load %arg2[%c0_3, %c0_4] : memref<1x160xf32, #tpu.memory_space<vmem>>, vector<1x160xf32>
    %4 = vector.broadcast %3 : vector<1x160xf32> to vector<16x160xf32>
    %5 = arith.addf %2, %4 : vector<16x160xf32>
    %cst_5 = arith.constant 0.000000e+00 : f32
    %6 = vector.broadcast %cst_5 : f32 to vector<16x160xf32>
    %7 = arith.maximumf %5, %6 : vector<16x160xf32>
    %8 = vector.extract_strided_slice %7 {offsets = [0, 0], sizes = [16, 64], strides = [1, 1]} : vector<16x160xf32> to vector<16x64xf32>
    %9 = vector.extract_strided_slice %7 {offsets = [0, 64], sizes = [16, 64], strides = [1, 1]} : vector<16x160xf32> to vector<16x64xf32>
    %10 = arith.addf %8, %9 : vector<16x64xf32>
    %11 = vector.extract_strided_slice %7 {offsets = [0, 128], sizes = [16, 32], strides = [1, 1]} : vector<16x160xf32> to vector<16x32xf32>
    %c0_6 = arith.constant 0 : index
    %c0_7 = arith.constant 0 : index
    %12 = vector.load %arg3[%c0_6, %c0_7] : memref<32x64xf32, #tpu.memory_space<vmem>>, vector<32x64xf32>
    %cst_8 = arith.constant dense<0.000000e+00> : vector<16x64xf32>
    %13 = tpu.matmul %11, %12, %cst_8 {dimension_numbers = #tpu.dot_dimension_numbers<[1], [0], [0], [1], [0, 0, 1, 1], [], []>} : vector<16x32xf32>, vector<32x64xf32>, vector<16x64xf32> -> vector<16x64xf32>
    %c0_9 = arith.constant 0 : index
    %c0_10 = arith.constant 0 : index
    %14 = vector.load %arg4[%c0_9, %c0_10] : memref<1x64xf32, #tpu.memory_space<vmem>>, vector<1x64xf32>
    %15 = vector.broadcast %14 : vector<1x64xf32> to vector<16x64xf32>
    %16 = arith.addf %13, %15 : vector<16x64xf32>
    %cst_11 = arith.constant 0.000000e+00 : f32
    %17 = vector.broadcast %cst_11 : f32 to vector<16x64xf32>
    %18 = arith.maximumf %16, %17 : vector<16x64xf32>
    %19 = arith.addf %10, %18 : vector<16x64xf32>
    %c0_12 = arith.constant 0 : index
    %c0_13 = arith.constant 0 : index
    %20 = vector.load %arg5[%c0_12, %c0_13] : memref<16x64xf32, #tpu.memory_space<vmem>>, vector<16x64xf32>
    tpu.vector_store %arg5[%c0_12, %c0_13], %19 {strides = array<i32>} : memref<16x64xf32, #tpu.memory_space<vmem>>, vector<16x64xf32>,
    return
  }
}

</mosaic_0001>

<llo_original>
// kernel: conv_block_forward.1
$region0: #{conv_block_forward.1}
  #allocation0 [shape = 'u32[]', space=smem, size = 0x4, offset = 0x4, fixed_abs, tag = 'smem constant byte address 0x4 - core index']
  #allocation1 [shape = 'u32[144,128]{1,0:T(1,128)}', space=vmem, size = 0x12000, scoped, tag = 'internal scratch']
  %s0 = inlined_call_operand.vmem [shape: f32[16,512], index: 0, kind: input, shape index: {}]
  %s1 = inlined_call_operand.vmem [shape: f32[512,160], index: 1, kind: input, shape index: {}]
  %s2 = inlined_call_operand.vmem [shape: f32[1,160], index: 2, kind: input, shape index: {}]
  %s3 = inlined_call_operand.vmem [shape: f32[32,64], index: 3, kind: input, shape index: {}]
  %s4 = inlined_call_operand.vmem [shape: f32[1,64], index: 4, kind: input, shape index: {}]
  %s5 = inlined_call_operand.vmem [shape: f32[16,64], index: 5, kind: output, shape index: {}]
  %s6 = sld [smem:[#allocation0]]
  $region30: #{conv_block_forward.1} parent=0
    _
  %s8 = ssub.s32 1, %s6
  %s9 = scalar_select 0, %s8, %s6
  // Predicated region
  $region2: #{conv_block_forward.1} parent=0 // pred_check
    _
  $region3: #{conv_block_forward.1} parent=0 // pred_check_branch
    %11 = sbr.rel (0) target = $region5
  $region4: #{conv_block_forward.1} parent=0 // pred_region
    _
  $region5: #{conv_block_forward.1} parent=0 // pred_fallthru
    _
  // Predicated region
  $region6: #{conv_block_forward.1} parent=0 // pred_check
    _
  $region7: #{conv_block_forward.1} parent=0 // pred_check_branch
    %13 = sbr.rel (0) target = $region9
  $region8: #{conv_block_forward.1} parent=0 // pred_region
    _
  $region9: #{conv_block_forward.1} parent=0 // pred_fallthru
    _
  // Predicated region
  $region10: #{conv_block_forward.1} parent=0 // pred_check
    _
  $region11: #{conv_block_forward.1} parent=0 // pred_check_branch
    %15 = sbr.rel (0) target = $region13
  $region12: #{conv_block_forward.1} parent=0 // pred_region
    _
  $region13: #{conv_block_forward.1} parent=0 // pred_fallthru
    _
  // Predicated region
  $region14: #{conv_block_forward.1} parent=0 // pred_check
    _
  $region15: #{conv_block_forward.1} parent=0 // pred_check_branch
    %17 = sbr.rel (0) target = $region17
  $region16: #{conv_block_forward.1} parent=0 // pred_region
    _
  $region17: #{conv_block_forward.1} parent=0 // pred_fallthru
    _
  // Predicated region
  $region18: #{conv_block_forward.1} parent=0 // pred_check
    _
  $region19: #{conv_block_forward.1} parent=0 // pred_check_branch
    %19 = sbr.rel (0) target = $region21
  $region20: #{conv_block_forward.1} parent=0 // pred_region
    _
  $region21: #{conv_block_forward.1} parent=0 // pred_fallthru
    _
  %v20 = vld [vmem:[%s0] sm:$0xff]
  %v21 = vld [vmem:[%s0 + $0x8] sm:$0xff]
  %v22 = vld [vmem:[%s0 + $0x10] sm:$0xff]
  %v23 = vld [vmem:[%s0 + $0x18] sm:$0xff]
  %v24 = vld [vmem:[%s0 + $0x20] sm:$0xff]
  %v25 = vld [vmem:[%s0 + $0x28] sm:$0xff]
  %v26 = vld [vmem:[%s0 + $0x30] sm:$0xff]
  %v27 = vld [vmem:[%s0 + $0x38] sm:$0xff]
  %v28 = vld [vmem:[%s1] sm:$0xff]
  %v29 = vld [vmem:[%s1 + $0x8] sm:$0xff]
  %v30 = vld [vmem:[%s1 + $0x10] sm:$0xff]
  %v31 = vld [vmem:[%s1 + $0x18] sm:$0xff]
  %v32 = vld [vmem:[%s1 + $0x20] sm:$0xff]
  %v33 = vld [vmem:[%s1 + $0x28] sm:$0xff]
  %v34 = vld [vmem:[%s1 + $0x30] sm:$0xff]
  %v35 = vld [vmem:[%s1 + $0x38] sm:$0xff]
  %v36 = vld [vmem:[%s1 + $0x40] sm:$0xff]
  %v37 = vld [vmem:[%s1 + $0x48] sm:$0xff]
  %v38 = vld [vmem:[%s1 + $0x50] sm:$0xff]
  %v39 = vld [vmem:[%s1 + $0x58] sm:$0xff]
  %v40 = vld [vmem:[%s1 + $0x60] sm:$0xff]
  %v41 = vld [vmem:[%s1 + $0x68] sm:$0xff]
  %v42 = vld [vmem:[%s1 + $0x70] sm:$0xff]
  %v43 = vld [vmem:[%s1 + $0x78] sm:$0xff]
  %v44 = vld [vmem:[%s1 + $0x80] sm:$0xff]
  %v45 = vld [vmem:[%s1 + $0x88] sm:$0xff]
  %v46 = vld [vmem:[%s1 + $0x90] sm:$0xff]
  %v47 = vld [vmem:[%s1 + $0x98] sm:$0xff]
  %v48 = vld [vmem:[%s1 + $0xa0] sm:$0xff]
  %v49 = vld [vmem:[%s1 + $0xa8] sm:$0xff]
  %v50 = vld [vmem:[%s1 + $0xb0] sm:$0xff]
  %v51 = vld [vmem:[%s1 + $0xb8] sm:$0xff]
  %v52 = vld [vmem:[%s1 + $0xc0] sm:$0xff]
  %v53 = vld [vmem:[%s1 + $0xc8] sm:$0xff]
  %v54 = vld [vmem:[%s1 + $0xd0] sm:$0xff]
  %v55 = vld [vmem:[%s1 + $0xd8] sm:$0xff]
  %v56 = vld [vmem:[%s1 + $0xe0] sm:$0xff]
  %v57 = vld [vmem:[%s1 + $0xe8] sm:$0xff]
  %v58 = vld [vmem:[%s1 + $0xf0] sm:$0xff]
  %v59 = vld [vmem:[%s1 + $0xf8] sm:$0xff]
  %v60 = vld [vmem:[%s1 + $0x100] sm:$0xff]
  %v61 = vld [vmem:[%s1 + $0x108] sm:$0xff]
  %v62 = vld [vmem:[%s1 + $0x110] sm:$0xff]
  %v63 = vld [vmem:[%s1 + $0x118] sm:$0xff]
  %v64 = vld [vmem:[%s1 + $0x120] sm:$0xff]
  %v65 = vld [vmem:[%s1 + $0x128] sm:$0xff]
  %v66 = vld [vmem:[%s1 + $0x130] sm:$0xff]
  %v67 = vld [vmem:[%s1 + $0x138] sm:$0xff]
  %v68 = vld [vmem:[%s1 + $0x140] sm:$0xff]
  %v69 = vld [vmem:[%s1 + $0x148] sm:$0xff]
  %v70 = vld [vmem:[%s1 + $0x150] sm:$0xff]
  %v71 = vld [vmem:[%s1 + $0x158] sm:$0xff]
  %v72 = vld [vmem:[%s1 + $0x160] sm:$0xff]
  %v73 = vld [vmem:[%s1 + $0x168] sm:$0xff]
  %v74 = vld [vmem:[%s1 + $0x170] sm:$0xff]
  %v75 = vld [vmem:[%s1 + $0x178] sm:$0xff]
  %v76 = vld [vmem:[%s1 + $0x180] sm:$0xff]
  %v77 = vld [vmem:[%s1 + $0x188] sm:$0xff]
  %v78 = vld [vmem:[%s1 + $0x190] sm:$0xff]
  %v79 = vld [vmem:[%s1 + $0x198] sm:$0xff]
  %v80 = vld [vmem:[%s1 + $0x1a0] sm:$0xff]
  %v81 = vld [vmem:[%s1 + $0x1a8] sm:$0xff]
  %v82 = vld [vmem:[%s1 + $0x1b0] sm:$0xff]
  %v83 = vld [vmem:[%s1 + $0x1b8] sm:$0xff]
  %v84 = vld [vmem:[%s1 + $0x1c0] sm:$0xff]
  %v85 = vld [vmem:[%s1 + $0x1c8] sm:$0xff]
  %v86 = vld [vmem:[%s1 + $0x1d0] sm:$0xff]
  %v87 = vld [vmem:[%s1 + $0x1d8] sm:$0xff]
  %v88 = vld [vmem:[%s1 + $0x1e0] sm:$0xff]
  %v89 = vld [vmem:[%s1 + $0x1e8] sm:$0xff]
  %v90 = vld [vmem:[%s1 + $0x1f0] sm:$0xff]
  %v91 = vld [vmem:[%s1 + $0x1f8] sm:$0xff]
  %v92 = vld [vmem:[%s1 + $0x200] sm:$0xff]
  %v93 = vld [vmem:[%s1 + $0x208] sm:$0xff]
  %v94 = vld [vmem:[%s1 + $0x210] sm:$0xff]
  %v95 = vld [vmem:[%s1 + $0x218] sm:$0xff]
  %v96 = vld [vmem:[%s1 + $0x220] sm:$0xff]
  %v97 = vld [vmem:[%s1 + $0x228] sm:$0xff]
  %v98 = vld [vmem:[%s1 + $0x230] sm:$0xff]
  %v99 = vld [vmem:[%s1 + $0x238] sm:$0xff]
  %v100 = vld [vmem:[%s1 + $0x240] sm:$0xff]
  %v101 = vld [vmem:[%s1 + $0x248] sm:$0xff]
  %v102 = vld [vmem:[%s1 + $0x250] sm:$0xff]
  %v103 = vld [vmem:[%s1 + $0x258] sm:$0xff]
  %v104 = vld [vmem:[%s1 + $0x260] sm:$0xff]
  %v105 = vld [vmem:[%s1 + $0x268] sm:$0xff]
  %v106 = vld [vmem:[%s1 + $0x270] sm:$0xff]
  %v107 = vld [vmem:[%s1 + $0x278] sm:$0xff]
  %v108 = vld [vmem:[%s1 + $0x280] sm:$0xff]
  %v109 = vld [vmem:[%s1 + $0x288] sm:$0xff]
  %v110 = vld [vmem:[%s1 + $0x290] sm:$0xff]
  %v111 = vld [vmem:[%s1 + $0x298] sm:$0xff]
  %v112 = vld [vmem:[%s1 + $0x2a0] sm:$0xff]
  %v113 = vld [vmem:[%s1 + $0x2a8] sm:$0xff]
  %v114 = vld [vmem:[%s1 + $0x2b0] sm:$0xff]
  %v115 = vld [vmem:[%s1 + $0x2b8] sm:$0xff]
  %v116 = vld [vmem:[%s1 + $0x2c0] sm:$0xff]
  %v117 = vld [vmem:[%s1 + $0x2c8] sm:$0xff]
  %v118 = vld [vmem:[%s1 + $0x2d0] sm:$0xff]
  %v119 = vld [vmem:[%s1 + $0x2d8] sm:$0xff]
  %v120 = vld [vmem:[%s1 + $0x2e0] sm:$0xff]
  %v121 = vld [vmem:[%s1 + $0x2e8] sm:$0xff]
  %v122 = vld [vmem:[%s1 + $0x2f0] sm:$0xff]
  %v123 = vld [vmem:[%s1 + $0x2f8] sm:$0xff]
  %v124 = vld [vmem:[%s1 + $0x300] sm:$0xff]
  %v125 = vld [vmem:[%s1 + $0x308] sm:$0xff]
  %v126 = vld [vmem:[%s1 + $0x310] sm:$0xff]
  %v127 = vld [vmem:[%s1 + $0x318] sm:$0xff]
  %v128 = vld [vmem:[%s1 + $0x320] sm:$0xff]
  %v129 = vld [vmem:[%s1 + $0x328] sm:$0xff]
  %v130 = vld [vmem:[%s1 + $0x330] sm:$0xff]
  %v131 = vld [vmem:[%s1 + $0x338] sm:$0xff]
  %v132 = vld [vmem:[%s1 + $0x340] sm:$0xff]
  %v133 = vld [vmem:[%s1 + $0x348] sm:$0xff]
  %v134 = vld [vmem:[%s1 + $0x350] sm:$0xff]
  %v135 = vld [vmem:[%s1 + $0x358] sm:$0xff]
  %v136 = vld [vmem:[%s1 + $0x360] sm:$0xff]
  %v137 = vld [vmem:[%s1 + $0x368] sm:$0xff]
  %v138 = vld [vmem:[%s1 + $0x370] sm:$0xff]
  %v139 = vld [vmem:[%s1 + $0x378] sm:$0xff]
  %v140 = vld [vmem:[%s1 + $0x380] sm:$0xff]
  %v141 = vld [vmem:[%s1 + $0x388] sm:$0xff]
  %v142 = vld [vmem:[%s1 + $0x390] sm:$0xff]
  %v143 = vld [vmem:[%s1 + $0x398] sm:$0xff]
  %v144 = vld [vmem:[%s1 + $0x3a0] sm:$0xff]
  %v145 = vld [vmem:[%s1 + $0x3a8] sm:$0xff]
  %v146 = vld [vmem:[%s1 + $0x3b0] sm:$0xff]
  %v147 = vld [vmem:[%s1 + $0x3b8] sm:$0xff]
  %v148 = vld [vmem:[%s1 + $0x3c0] sm:$0xff]
  %v149 = vld [vmem:[%s1 + $0x3c8] sm:$0xff]
  %v150 = vld [vmem:[%s1 + $0x3d0] sm:$0xff]
  %v151 = vld [vmem:[%s1 + $0x3d8] sm:$0xff]
  %v152 = vld [vmem:[%s1 + $0x3e0] sm:$0xff]
  %v153 = vld [vmem:[%s1 + $0x3e8] sm:$0xff]
  %v154 = vld [vmem:[%s1 + $0x3f0] sm:$0xff]
  %v155 = vld [vmem:[%s1 + $0x3f8] sm:$0xff]
  %v156 = vld [vmem:[%s2] sm:$0x3]
  %v158 = vlaneseq
  %v159 = vshrl.u32 %v158, 7
  %v160 = vsub.s32 0, %v159
  %v161 = vrot.slane %v156, %v160
  %v162 = vlaneseq
  %v163 = vshrl.u32 %v162, 7
  %v164 = vsub.s32 1, %v163
  %v165 = vrot.slane %v156, %v164
  %168 = vmatprep.subr.mxu0 %v59
  %169 = vmatpush1.msra.mxu0 %v58
  %170 = vmatprep.subr.mxu0 %v57
  %171 = vmatpush1.msra.mxu0 %v56
  %172 = vmatprep.subr.mxu0 %v55
  %173 = vmatpush1.msra.mxu0 %v54
  %174 = vmatprep.subr.mxu0 %v53
  %175 = vmatpush1.msra.mxu0 %v52
  %176 = vmatprep.subr.mxu0 %v51
  %177 = vmatpush1.msra.mxu0 %v50
  %178 = vmatprep.subr.mxu0 %v49
  %179 = vmatpush1.msra.mxu0 %v48
  %180 = vmatprep.subr.mxu0 %v47
  %181 = vmatpush1.msra.mxu0 %v46
  %182 = vmatprep.subr.mxu0 %v45
  %183 = vmatpush1.msra.mxu0 %v44
  %184 = vmatprep.subr.mxu0 %v43
  %185 = vmatpush1.msra.mxu0 %v42
  %186 = vmatprep.subr.mxu0 %v41
  %187 = vmatpush1.msra.mxu0 %v40
  %188 = vmatprep.subr.mxu0 %v39
  %189 = vmatpush1.msra.mxu0 %v38
  %190 = vmatprep.subr.mxu0 %v37
  %191 = vmatpush1.msra.mxu0 %v36
  %192 = vmatprep.subr.mxu0 %v35
  %193 = vmatpush1.msra.mxu0 %v34
  %194 = vmatprep.subr.mxu0 %v33
  %195 = vmatpush1.msra.mxu0 %v32
  %196 = vmatprep.subr.mxu0 %v31
  %197 = vmatpush1.msra.mxu0 %v30
  %198 = vmatprep.subr.mxu0 %v29
  %199 = vmatpush1.msra.mxu0 %v28
  %200 = vmatprep.subr.mxu0 %v91
  %201 = vmatpush2.msra.mxu0 %v90
  %202 = vmatprep.subr.mxu0 %v89
  %203 = vmatpush2.msra.mxu0 %v88
  %204 = vmatprep.subr.mxu0 %v87
  %205 = vmatpush2.msra.mxu0 %v86
  %206 = vmatprep.subr.mxu0 %v85
  %207 = vmatpush2.msra.mxu0 %v84
  %208 = vmatprep.subr.mxu0 %v83
  %209 = vmatpush2.msra.mxu0 %v82
  %210 = vmatprep.subr.mxu0 %v81
  %211 = vmatpush2.msra.mxu0 %v80
  %212 = vmatprep.subr.mxu0 %v79
  %213 = vmatpush2.msra.mxu0 %v78
  %214 = vmatprep.subr.mxu0 %v77
  %215 = vmatpush2.msra.mxu0 %v76
  %216 = vmatprep.subr.mxu0 %v75
  %217 = vmatpush2.msra.mxu0 %v74
  %218 = vmatprep.subr.mxu0 %v73
  %219 = vmatpush2.msra.mxu0 %v72
  %220 = vmatprep.subr.mxu0 %v71
  %221 = vmatpush2.msra.mxu0 %v70
  %222 = vmatprep.subr.mxu0 %v69
  %223 = vmatpush2.msra.mxu0 %v68
  %224 = vmatprep.subr.mxu0 %v67
  %225 = vmatpush2.msra.mxu0 %v66
  %226 = vmatprep.subr.mxu0 %v65
  %227 = vmatpush2.msra.mxu0 %v64
  %228 = vmatprep.subr.mxu0 %v63
  %229 = vmatpush2.msra.mxu0 %v62
  %230 = vmatprep.subr.mxu0 %v61
  %231 = vmatpush2.msra.mxu0 %v60
  %232 = vmatprep.mubr.f32.mxu0 %v21
  %233 = vmatmul.mubr.f32.gmra.mxu0 %v20
  %v234 = vpop.f32.mrf.mxu0
  %v235 = vadd.f32 %v161, %v234
  %v236 = vpop.f32.mrf.mxu0
  %v237 = vadd.f32 %v165, %v236
  %238 = vmatprep.mubr.f32.mxu0 %v25
  %239 = vmatmul.mubr.f32.gmra.mxu0 %v24
  %v240 = vpop.f32.mrf.mxu0
  %v241 = vadd.f32 %v161, %v240
  %v242 = vpop.f32.mrf.mxu0
  %v243 = vadd.f32 %v165, %v242
  %244 = vdwg.mxu0
  %245 = vmatprep.subr.mxu0 %v123
  %246 = vmatpush1.msra.mxu0 %v122
  %247 = vmatprep.subr.mxu0 %v121
  %248 = vmatpush1.msra.mxu0 %v120
  %249 = vmatprep.subr.mxu0 %v119
  %250 = vmatpush1.msra.mxu0 %v118
  %251 = vmatprep.subr.mxu0 %v117
  %252 = vmatpush1.msra.mxu0 %v116
  %253 = vmatprep.subr.mxu0 %v115
  %254 = vmatpush1.msra.mxu0 %v114
  %255 = vmatprep.subr.mxu0 %v113
  %256 = vmatpush1.msra.mxu0 %v112
  %257 = vmatprep.subr.mxu0 %v111
  %258 = vmatpush1.msra.mxu0 %v110
  %259 = vmatprep.subr.mxu0 %v109
  %260 = vmatpush1.msra.mxu0 %v108
  %261 = vmatprep.subr.mxu0 %v107
  %262 = vmatpush1.msra.mxu0 %v106
  %263 = vmatprep.subr.mxu0 %v105
  %264 = vmatpush1.msra.mxu0 %v104
  %265 = vmatprep.subr.mxu0 %v103
  %266 = vmatpush1.msra.mxu0 %v102
  %267 = vmatprep.subr.mxu0 %v101
  %268 = vmatpush1.msra.mxu0 %v100
  %269 = vmatprep.subr.mxu0 %v99
  %270 = vmatpush1.msra.mxu0 %v98
  %271 = vmatprep.subr.mxu0 %v97
  %272 = vmatpush1.msra.mxu0 %v96
  %273 = vmatprep.subr.mxu0 %v95
  %274 = vmatpush1.msra.mxu0 %v94
  %275 = vmatprep.subr.mxu0 %v93
  %276 = vmatpush1.msra.mxu0 %v92
  %277 = vmatprep.subr.mxu0 %v155
  %278 = vmatpush2.msra.mxu0 %v154
  %279 = vmatprep.subr.mxu0 %v153
  %280 = vmatpush2.msra.mxu0 %v152
  %281 = vmatprep.subr.mxu0 %v151
  %282 = vmatpush2.msra.mxu0 %v150
  %283 = vmatprep.subr.mxu0 %v149
  %284 = vmatpush2.msra.mxu0 %v148
  %285 = vmatprep.subr.mxu0 %v147
  %286 = vmatpush2.msra.mxu0 %v146
  %287 = vmatprep.subr.mxu0 %v145
  %288 = vmatpush2.msra.mxu0 %v144
  %289 = vmatprep.subr.mxu0 %v143
  %290 = vmatpush2.msra.mxu0 %v142
  %291 = vmatprep.subr.mxu0 %v141
  %292 = vmatpush2.msra.mxu0 %v140
  %293 = vmatprep.subr.mxu0 %v139
  %294 = vmatpush2.msra.mxu0 %v138
  %295 = vmatprep.subr.mxu0 %v137
  %296 = vmatpush2.msra.mxu0 %v136
  %297 = vmatprep.subr.mxu0 %v135
  %298 = vmatpush2.msra.mxu0 %v134
  %299 = vmatprep.subr.mxu0 %v133
  %300 = vmatpush2.msra.mxu0 %v132
  %301 = vmatprep.subr.mxu0 %v131
  %302 = vmatpush2.msra.mxu0 %v130
  %303 = vmatprep.subr.mxu0 %v129
  %304 = vmatpush2.msra.mxu0 %v128
  %305 = vmatprep.subr.mxu0 %v127
  %306 = vmatpush2.msra.mxu0 %v126
  %307 = vmatprep.subr.mxu0 %v125
  %308 = vmatpush2.msra.mxu0 %v124
  %309 = vmatprep.mubr.f32.mxu0 %v23
  %310 = vmatmul.mubr.f32.gmra.mxu0 %v22
  %v311 = vpop.f32.mrf.mxu0
  %v312 = vadd.f32 %v235, %v311
  %v313 = vpop.f32.mrf.mxu0
  %v314 = vadd.f32 %v237, %v313
  %315 = vmatprep.mubr.f32.mxu0 %v27
  %316 = vmatmul.mubr.f32.gmra.mxu0 %v26
  %v317 = vpop.f32.mrf.mxu0
  %v318 = vadd.f32 %v241, %v317
  %v319 = vpop.f32.mrf.mxu0
  %v320 = vadd.f32 %v243, %v319
  %321 = vdwg.mxu0
  %v322 = vmax.f32 %v312, 0.0
  %v323 = vmax.f32 %v314, 0.0
  %v324 = vmax.f32 %v318, 0.0
  %v325 = vmax.f32 %v320, 0.0
  %328 = vrot.lane.b32.xlu0 %v322, 64
  %v329 = vpop.permute.xlu0 %328
  %330 = vrot.lane.b32.xlu0 %v324, 64
  %v331 = vpop.permute.xlu0 %330
  %v334 = vadd.f32 %v322, %v329
  %v335 = vadd.f32 %v324, %v331
  %v336 = vld [vmem:[%s3] sm:$0xff]
  %v337 = vld [vmem:[%s3 + $0x8] sm:$0xff]
  %v338 = vld [vmem:[%s3 + $0x10] sm:$0xff]
  %v339 = vld [vmem:[%s3 + $0x18] sm:$0xff]
  %v340 = vld [vmem:[%s4] sm:$0x1]
  %v342 = vlaneseq
  %v343 = vshrl.u32 %v342, 7
  %v344 = vsub.s32 0, %v343
  %v345 = vrot.slane %v340, %v344
  %vm347 = vcmask 261120
  %v349 = vsel %vm347, %v323, 0
  %v352 = vsel %vm347, %v325, 0
  %354 = vmatprep.subr.mxu0 0.0
  %355 = vmatpush1.msra.mxu0 0.0
  %356 = vmatprep.subr.mxu0 0.0
  %357 = vmatpush1.msra.mxu0 0.0
  %358 = vmatprep.subr.mxu0 0.0
  %359 = vmatpush1.msra.mxu0 0.0
  %360 = vmatprep.subr.mxu0 0.0
  %361 = vmatpush1.msra.mxu0 0.0
  %362 = vmatprep.subr.mxu0 0.0
  %363 = vmatpush1.msra.mxu0 0.0
  %364 = vmatprep.subr.mxu0 0.0
  %365 = vmatpush1.msra.mxu0 0.0
  %366 = vmatprep.subr.mxu0 0.0
  %367 = vmatpush1.msra.mxu0 0.0
  %368 = vmatprep.subr.mxu0 0.0
  %369 = vmatpush1.msra.mxu0 0.0
  %370 = vmatprep.subr.mxu0 0.0
  %371 = vmatpush1.msra.mxu0 0.0
  %372 = vmatprep.subr.mxu0 0.0
  %373 = vmatpush1.msra.mxu0 0.0
  %374 = vmatprep.subr.mxu0 0.0
  %375 = vmatpush1.msra.mxu0 0.0
  %376 = vmatprep.subr.mxu0 0.0
  %377 = vmatpush1.msra.mxu0 0.0
  %378 = vmatprep.subr.mxu0 0.0
  %379 = vmatpush1.msra.mxu0 %v339
  %380 = vmatprep.subr.mxu0 0.0
  %381 = vmatpush1.msra.mxu0 %v338
  %382 = vmatprep.subr.mxu0 0.0
  %383 = vmatpush1.msra.mxu0 %v337
  %384 = vmatprep.subr.mxu0 0.0
  %385 = vmatpush1.msra.mxu0 %v336
  %386 = vmatprep.subr.mxu0 0.0
  %387 = vmatpush2.msra.mxu0 0.0
  %388 = vmatprep.subr.mxu0 0.0
  %389 = vmatpush2.msra.mxu0 0.0
  %390 = vmatprep.subr.mxu0 0.0
  %391 = vmatpush2.msra.mxu0 0.0
  %392 = vmatprep.subr.mxu0 0.0
  %393 = vmatpush2.msra.mxu0 0.0
  %394 = vmatprep.subr.mxu0 0.0
  %395 = vmatpush2.msra.mxu0 0.0
  %396 = vmatprep.subr.mxu0 0.0
  %397 = vmatpush2.msra.mxu0 0.0
  %398 = vmatprep.subr.mxu0 0.0
  %399 = vmatpush2.msra.mxu0 0.0
  %400 = vmatprep.subr.mxu0 0.0
  %401 = vmatpush2.msra.mxu0 0.0
  %402 = vmatprep.subr.mxu0 0.0
  %403 = vmatpush2.msra.mxu0 0.0
  %404 = vmatprep.subr.mxu0 0.0
  %405 = vmatpush2.msra.mxu0 0.0
  %406 = vmatprep.subr.mxu0 0.0
  %407 = vmatpush2.msra.mxu0 0.0
  %408 = vmatprep.subr.mxu0 0.0
  %409 = vmatpush2.msra.mxu0 0.0
  %410 = vmatprep.subr.mxu0 0.0
  %411 = vmatpush2.msra.mxu0 0.0
  %412 = vmatprep.subr.mxu0 0.0
  %413 = vmatpush2.msra.mxu0 0.0
  %414 = vmatprep.subr.mxu0 0.0
  %415 = vmatpush2.msra.mxu0 0.0
  %416 = vmatprep.subr.mxu0 0.0
  %417 = vmatpush2.msra.mxu0 0.0
  %418 = vmatprep.mubr.f32.mxu0 0.0
  %419 = vmatmul.mubr.f32.gmra.mxu0 %v349
  %v420 = vpop.f32.mrf.mxu0
  %v421 = vadd.f32 %v345, %v420
  %v422 = vpop.f32.mrf.mxu0
  %423 = vmatprep.mubr.f32.mxu0 0.0
  %424 = vmatmul.mubr.f32.gmra.mxu0 %v352
  %v425 = vpop.f32.mrf.mxu0
  %v426 = vadd.f32 %v345, %v425
  %v427 = vpop.f32.mrf.mxu0
  %428 = vdwg.mxu0
  %v429 = vmax.f32 %v421, 0.0
  %v430 = vmax.f32 %v426, 0.0
  %v431 = vadd.f32 %v334, %v429
  %v432 = vadd.f32 %v335, %v430
  %vm433 = vcmask 523264
  %434 = vst.msk [vmem:[%s5] sm:$0xff] %vm433, %v431
  %435 = vst.msk [vmem:[%s5 + $0x8] sm:$0xff] %vm433, %v432
  // Predicated region
  $region22: #{conv_block_forward.1} parent=0 // pred_check
    _
  $region23: #{conv_block_forward.1} parent=0 // pred_check_branch
    %437 = sbr.rel (0) target = $region25
  $region24: #{conv_block_forward.1} parent=0 // pred_region
    _
  $region25: #{conv_block_forward.1} parent=0 // pred_fallthru
    _
  // Predicated region
  $region26: #{conv_block_forward.1} parent=0 // pred_check
    _
  $region27: #{conv_block_forward.1} parent=0 // pred_check_branch
    %439 = sbr.rel (0) target = $region29
  $region28: #{conv_block_forward.1} parent=0 // pred_region
    _
  $region29: #{conv_block_forward.1} parent=0 // pred_fallthru
    _

</llo_original>
